<compile_context>
chip_gen: v7x
topology: tpu7x:2x2x1
jax: 0.10.0
libtpu: 0.0.40
codegen_flags: <defaults>
</compile_context>

<pallas_src>
import functools

import numpy as np
import jax
import jax.numpy as jnp
from jax import lax
from jax.experimental import pallas as pl
from jax.experimental.pallas import tpu as pltpu


def _round_up(x, m):
    return ((x + m - 1) // m) * m


def _encode_strings(strings, max_word_length):
    """Pack ASCII strings into fixed-width byte rows viewed as int32 words -> (len, W)."""
    assert max_word_length % 4 == 0
    # numpy's |S dtype silently truncates longer strings, which could alias a
    # full-width class row -> reject at pack time instead.
    assert all(len(s) <= max_word_length for s in strings), \
        "input string longer than the class-derived width"
    arr = np.array(strings, dtype="|S" + str(max_word_length)).view(np.int32)
    return arr.reshape(len(strings), max_word_length // 4)


def _label_encoder_kernel(classes_ref, x_ref, out_ref, *,
                          num_classes, num_words, chunk_lanes, class_unroll):
    # classes_ref: SMEM (C*W,) int32      -- scalar-prefetched class table
    # x_ref:       VMEM (W, 8, TILE_L)    -- rows packed across sublanes + lanes
    # out_ref:     VMEM (8, TILE_L)       -- lane/sublane-dense output slab
    tile_lanes = out_ref.shape[-1]
    num_chunks = tile_lanes // chunk_lanes

    def chunk_body(j, carry):
        off = pl.multiple_of(j * chunk_lanes, chunk_lanes)
        # Load each word plane once per chunk, straight from the ref (plain vld,
        # full (8,128)-dense operands, no sublane-slice relayout work).
        words = [x_ref[w, :, pl.ds(off, chunk_lanes)] for w in range(num_words)]

        def match_class(c):
            m = words[0] == classes_ref[c * num_words]
            for w in range(1, num_words):
                m = jnp.logical_and(m, words[w] == classes_ref[c * num_words + w])
            return m

        # Unseen rows (and the zero-padded tail rows) stay at the -1 sentinel.
        acc = jnp.full((8, chunk_lanes), -1, jnp.int32)
        if num_classes <= 32:
            # Small class tables: full unroll, class words are static SMEM reads.
            for c in range(num_classes):
                acc = jnp.where(match_class(c), jnp.int32(c), acc)
        else:
            # Large class tables: rolled loop with dynamic SMEM scalar reads
            # (scalar slot), keeping code size and vreg live ranges bounded.
            def class_body(c, a):
                return jnp.where(match_class(c), c, a)
            acc = lax.fori_loop(0, num_classes, class_body, acc,
                                unroll=class_unroll)

        out_ref[:, pl.ds(off, chunk_lanes)] = acc
        return carry

    lax.fori_loop(0, num_chunks, chunk_body, 0)


def string_label_encode(x_words, classes_words, *,
                        tile_lanes=16384, chunk_lanes=512, class_unroll=8):
    """x_words: (N, W) int32 word rows; classes_words: (C, W) int32.
    Returns (N,) int32 class indices (-1 = previously unseen label)."""
    N, W = x_words.shape
    C, Wc = classes_words.shape
    assert W == Wc, (W, Wc)

    # Lane bookkeeping: chunk is a multiple of 128 lanes, tile a multiple of the
    # chunk. Rows are spread over 8 sublanes, so NL lanes hold 8*NL rows.
    chunk_lanes = max(128, (chunk_lanes // 128) * 128)
    tile_lanes = max(chunk_lanes, (tile_lanes // chunk_lanes) * chunk_lanes)

    nl_min = _round_up(max(pl.cdiv(N, 8), 1), chunk_lanes)
    # Keep >=2 grid steps when there is enough work so the "parallel" axis can
    # shard across v7x's two TensorCores; never shrink below one chunk.
    if nl_min < 2 * tile_lanes:
        tile_lanes = max(chunk_lanes, _round_up(pl.cdiv(nl_min, 2), chunk_lanes))
    nl_padded = _round_up(nl_min, tile_lanes)
    n_padded = 8 * nl_padded

    # Repack rows across sublanes + lanes: (N, W) -> (W, 8, NL).
    # Zero-padded tail rows never equal a non-empty class string -> they yield
    # -1 and are sliced off below.
    xw = jnp.pad(x_words.astype(jnp.int32), ((0, n_padded - N), (0, 0)))
    x_packed = xw.T.reshape(W, 8, nl_padded)

    classes_flat = classes_words.reshape(-1).astype(jnp.int32)  # (C*W,) -> SMEM

    kernel = functools.partial(
        _label_encoder_kernel, num_classes=C, num_words=W,
        chunk_lanes=chunk_lanes, class_unroll=class_unroll)

    out = pl.pallas_call(
        kernel,
        out_shape=jax.ShapeDtypeStruct((8, nl_padded), jnp.int32),
        grid_spec=pltpu.PrefetchScalarGridSpec(
            num_scalar_prefetch=1,
            grid=(nl_padded // tile_lanes,),
            in_specs=[pl.BlockSpec((W, 8, tile_lanes), lambda i, cls: (0, 0, i))],
            out_specs=pl.BlockSpec((8, tile_lanes), lambda i, cls: (0, i)),
        ),
        compiler_params=pltpu.CompilerParams(
            dimension_semantics=("parallel",)),
    )(classes_flat, x_packed)

    # TODO(synk): the torch data-dependent assert on previously unseen labels has
    # no clean in-kernel equivalent; unseen rows return -1 so the host validates.
    return out.reshape(-1)[:N]


if __name__ == "__main__":
    classes = ["apple", "banana", "cherry", "date",
               "elderberry", "fig", "grape", "kiwi"]
    # sorted(set(...)) matches the torch module and guarantees unique class rows.
    # NOTE: an empty-string class would pack to all-zero words; real rows still
    # encode correctly, only the (discarded) zero-padded tail rows would match it.
    sorted_classes = sorted(set(classes))
    max_word_length = max(len(c) for c in sorted_classes)
    while max_word_length % 4 != 0:
        max_word_length += 1
    C = len(sorted_classes)
    W = max_word_length // 4

    classes_words = jnp.asarray(
        _encode_strings(sorted_classes, max_word_length))            # (C, W)

    # Deterministic inputs: pick N labels from the class list with PRNGKey(0).
    key = jax.random.PRNGKey(0)
    N = 16
    sel = np.asarray(jax.random.randint(key, (N,), 0, C))
    input_strings = [sorted_classes[int(i)] for i in sel]
    x_words = jnp.asarray(
        _encode_strings(input_strings, max_word_length))             # (N, W)

    result = string_label_encode(x_words, classes_words)
    jax.block_until_ready(result)

    expected = sel.astype(np.int32)
    assert result.shape == (N,), result.shape
    res_np = np.asarray(result)
    # Host-side equivalent of the torch "previously unseen labels" assert.
    assert np.all(res_np >= 0), "x contains previously unseen labels"
    assert np.array_equal(res_np, expected), (res_np, expected)
    print("KERNEL_OK")
</pallas_src>

<mosaic_0001>
module attributes {stable_mosaic.version = 11 : i64} {
  func.func @_label_encoder_kernel(%arg0: i32, %arg1: memref<24xi32, #tpu.memory_space<smem>>, %arg2: memref<3x8x512xi32, #tpu.memory_space<vmem>>, %arg3: memref<8x512xi32, #tpu.memory_space<vmem>>) attributes {dimension_semantics = [#tpu.dimension_semantics<parallel>], iteration_bounds = array<i64: 1>, scalar_prefetch = 1 : i64, scratch_operands = 0 : i64, tpu.core_type = #tpu.core_type<tc>, window_params = [{transform_indices = @transform_0, window_bounds = array<i64: 3, 8, 512>}, {transform_indices = @transform_1, window_bounds = array<i64: 8, 512>}]} {
    %c0_i32 = arith.constant 0 : i32
    %c512_i32 = arith.constant 512 : i32
    %0 = arith.muli %c0_i32, %c512_i32 : i32
    %1 = tpu.assume_multiple %0, 512 : i32
    %c0 = arith.constant 0 : index
    %c0_0 = arith.constant 0 : index
    %2 = arith.index_cast %1 : i32 to index
    %3 = vector.load %arg2[%c0, %c0_0, %2] : memref<3x8x512xi32, #tpu.memory_space<vmem>>, vector<1x8x512xi32>
    %4 = vector.shape_cast %3 : vector<1x8x512xi32> to vector<8x512xi32>
    %c1 = arith.constant 1 : index
    %c0_1 = arith.constant 0 : index
    %5 = arith.index_cast %1 : i32 to index
    %6 = vector.load %arg2[%c1, %c0_1, %5] : memref<3x8x512xi32, #tpu.memory_space<vmem>>, vector<1x8x512xi32>
    %7 = vector.shape_cast %6 : vector<1x8x512xi32> to vector<8x512xi32>
    %c2 = arith.constant 2 : index
    %c0_2 = arith.constant 0 : index
    %8 = arith.index_cast %1 : i32 to index
    %9 = vector.load %arg2[%c2, %c0_2, %8] : memref<3x8x512xi32, #tpu.memory_space<vmem>>, vector<1x8x512xi32>
    %10 = vector.shape_cast %9 : vector<1x8x512xi32> to vector<8x512xi32>
    %c-1_i32 = arith.constant -1 : i32
    %11 = vector.broadcast %c-1_i32 : i32 to vector<8x512xi32>
    %c0_3 = arith.constant 0 : index
    %12 = memref.load %arg1[%c0_3] : memref<24xi32, #tpu.memory_space<smem>>
    %13 = vector.broadcast %12 : i32 to vector<8x512xi32>
    %14 = arith.cmpi eq, %4, %13 : vector<8x512xi32>
    %c1_4 = arith.constant 1 : index
    %15 = memref.load %arg1[%c1_4] : memref<24xi32, #tpu.memory_space<smem>>
    %16 = vector.broadcast %15 : i32 to vector<8x512xi32>
    %17 = arith.cmpi eq, %7, %16 : vector<8x512xi32>
    %18 = arith.andi %14, %17 : vector<8x512xi1>
    %c2_5 = arith.constant 2 : index
    %19 = memref.load %arg1[%c2_5] : memref<24xi32, #tpu.memory_space<smem>>
    %20 = vector.broadcast %19 : i32 to vector<8x512xi32>
    %21 = arith.cmpi eq, %10, %20 : vector<8x512xi32>
    %22 = arith.andi %18, %21 : vector<8x512xi1>
    %c0_i32_6 = arith.constant 0 : i32
    %23 = vector.broadcast %c0_i32_6 : i32 to vector<8x512xi32>
    %24 = arith.select %22, %23, %11 : vector<8x512xi1>, vector<8x512xi32>
    %c3 = arith.constant 3 : index
    %25 = memref.load %arg1[%c3] : memref<24xi32, #tpu.memory_space<smem>>
    %26 = vector.broadcast %25 : i32 to vector<8x512xi32>
    %27 = arith.cmpi eq, %4, %26 : vector<8x512xi32>
    %c4 = arith.constant 4 : index
    %28 = memref.load %arg1[%c4] : memref<24xi32, #tpu.memory_space<smem>>
    %29 = vector.broadcast %28 : i32 to vector<8x512xi32>
    %30 = arith.cmpi eq, %7, %29 : vector<8x512xi32>
    %31 = arith.andi %27, %30 : vector<8x512xi1>
    %c5 = arith.constant 5 : index
    %32 = memref.load %arg1[%c5] : memref<24xi32, #tpu.memory_space<smem>>
    %33 = vector.broadcast %32 : i32 to vector<8x512xi32>
    %34 = arith.cmpi eq, %10, %33 : vector<8x512xi32>
    %35 = arith.andi %31, %34 : vector<8x512xi1>
    %c1_i32 = arith.constant 1 : i32
    %36 = vector.broadcast %c1_i32 : i32 to vector<8x512xi32>
    %37 = arith.select %35, %36, %24 : vector<8x512xi1>, vector<8x512xi32>
    %c6 = arith.constant 6 : index
    %38 = memref.load %arg1[%c6] : memref<24xi32, #tpu.memory_space<smem>>
    %39 = vector.broadcast %38 : i32 to vector<8x512xi32>
    %40 = arith.cmpi eq, %4, %39 : vector<8x512xi32>
    %c7 = arith.constant 7 : index
    %41 = memref.load %arg1[%c7] : memref<24xi32, #tpu.memory_space<smem>>
    %42 = vector.broadcast %41 : i32 to vector<8x512xi32>
    %43 = arith.cmpi eq, %7, %42 : vector<8x512xi32>
    %44 = arith.andi %40, %43 : vector<8x512xi1>
    %c8 = arith.constant 8 : index
    %45 = memref.load %arg1[%c8] : memref<24xi32, #tpu.memory_space<smem>>
    %46 = vector.broadcast %45 : i32 to vector<8x512xi32>
    %47 = arith.cmpi eq, %10, %46 : vector<8x512xi32>
    %48 = arith.andi %44, %47 : vector<8x512xi1>
    %c2_i32 = arith.constant 2 : i32
    %49 = vector.broadcast %c2_i32 : i32 to vector<8x512xi32>
    %50 = arith.select %48, %49, %37 : vector<8x512xi1>, vector<8x512xi32>
    %c9 = arith.constant 9 : index
    %51 = memref.load %arg1[%c9] : memref<24xi32, #tpu.memory_space<smem>>
    %52 = vector.broadcast %51 : i32 to vector<8x512xi32>
    %53 = arith.cmpi eq, %4, %52 : vector<8x512xi32>
    %c10 = arith.constant 10 : index
    %54 = memref.load %arg1[%c10] : memref<24xi32, #tpu.memory_space<smem>>
    %55 = vector.broadcast %54 : i32 to vector<8x512xi32>
    %56 = arith.cmpi eq, %7, %55 : vector<8x512xi32>
    %57 = arith.andi %53, %56 : vector<8x512xi1>
    %c11 = arith.constant 11 : index
    %58 = memref.load %arg1[%c11] : memref<24xi32, #tpu.memory_space<smem>>
    %59 = vector.broadcast %58 : i32 to vector<8x512xi32>
    %60 = arith.cmpi eq, %10, %59 : vector<8x512xi32>
    %61 = arith.andi %57, %60 : vector<8x512xi1>
    %c3_i32 = arith.constant 3 : i32
    %62 = vector.broadcast %c3_i32 : i32 to vector<8x512xi32>
    %63 = arith.select %61, %62, %50 : vector<8x512xi1>, vector<8x512xi32>
    %c12 = arith.constant 12 : index
    %64 = memref.load %arg1[%c12] : memref<24xi32, #tpu.memory_space<smem>>
    %65 = vector.broadcast %64 : i32 to vector<8x512xi32>
    %66 = arith.cmpi eq, %4, %65 : vector<8x512xi32>
    %c13 = arith.constant 13 : index
    %67 = memref.load %arg1[%c13] : memref<24xi32, #tpu.memory_space<smem>>
    %68 = vector.broadcast %67 : i32 to vector<8x512xi32>
    %69 = arith.cmpi eq, %7, %68 : vector<8x512xi32>
    %70 = arith.andi %66, %69 : vector<8x512xi1>
    %c14 = arith.constant 14 : index
    %71 = memref.load %arg1[%c14] : memref<24xi32, #tpu.memory_space<smem>>
    %72 = vector.broadcast %71 : i32 to vector<8x512xi32>
    %73 = arith.cmpi eq, %10, %72 : vector<8x512xi32>
    %74 = arith.andi %70, %73 : vector<8x512xi1>
    %c4_i32 = arith.constant 4 : i32
    %75 = vector.broadcast %c4_i32 : i32 to vector<8x512xi32>
    %76 = arith.select %74, %75, %63 : vector<8x512xi1>, vector<8x512xi32>
    %c15 = arith.constant 15 : index
    %77 = memref.load %arg1[%c15] : memref<24xi32, #tpu.memory_space<smem>>
    %78 = vector.broadcast %77 : i32 to vector<8x512xi32>
    %79 = arith.cmpi eq, %4, %78 : vector<8x512xi32>
    %c16 = arith.constant 16 : index
    %80 = memref.load %arg1[%c16] : memref<24xi32, #tpu.memory_space<smem>>
    %81 = vector.broadcast %80 : i32 to vector<8x512xi32>
    %82 = arith.cmpi eq, %7, %81 : vector<8x512xi32>
    %83 = arith.andi %79, %82 : vector<8x512xi1>
    %c17 = arith.constant 17 : index
    %84 = memref.load %arg1[%c17] : memref<24xi32, #tpu.memory_space<smem>>
    %85 = vector.broadcast %84 : i32 to vector<8x512xi32>
    %86 = arith.cmpi eq, %10, %85 : vector<8x512xi32>
    %87 = arith.andi %83, %86 : vector<8x512xi1>
    %c5_i32 = arith.constant 5 : i32
    %88 = vector.broadcast %c5_i32 : i32 to vector<8x512xi32>
    %89 = arith.select %87, %88, %76 : vector<8x512xi1>, vector<8x512xi32>
    %c18 = arith.constant 18 : index
    %90 = memref.load %arg1[%c18] : memref<24xi32, #tpu.memory_space<smem>>
    %91 = vector.broadcast %90 : i32 to vector<8x512xi32>
    %92 = arith.cmpi eq, %4, %91 : vector<8x512xi32>
    %c19 = arith.constant 19 : index
    %93 = memref.load %arg1[%c19] : memref<24xi32, #tpu.memory_space<smem>>
    %94 = vector.broadcast %93 : i32 to vector<8x512xi32>
    %95 = arith.cmpi eq, %7, %94 : vector<8x512xi32>
    %96 = arith.andi %92, %95 : vector<8x512xi1>
    %c20 = arith.constant 20 : index
    %97 = memref.load %arg1[%c20] : memref<24xi32, #tpu.memory_space<smem>>
    %98 = vector.broadcast %97 : i32 to vector<8x512xi32>
    %99 = arith.cmpi eq, %10, %98 : vector<8x512xi32>
    %100 = arith.andi %96, %99 : vector<8x512xi1>
    %c6_i32 = arith.constant 6 : i32
    %101 = vector.broadcast %c6_i32 : i32 to vector<8x512xi32>
    %102 = arith.select %100, %101, %89 : vector<8x512xi1>, vector<8x512xi32>
    %c21 = arith.constant 21 : index
    %103 = memref.load %arg1[%c21] : memref<24xi32, #tpu.memory_space<smem>>
    %104 = vector.broadcast %103 : i32 to vector<8x512xi32>
    %105 = arith.cmpi eq, %4, %104 : vector<8x512xi32>
    %c22 = arith.constant 22 : index
    %106 = memref.load %arg1[%c22] : memref<24xi32, #tpu.memory_space<smem>>
    %107 = vector.broadcast %106 : i32 to vector<8x512xi32>
    %108 = arith.cmpi eq, %7, %107 : vector<8x512xi32>
    %109 = arith.andi %105, %108 : vector<8x512xi1>
    %c23 = arith.constant 23 : index
    %110 = memref.load %arg1[%c23] : memref<24xi32, #tpu.memory_space<smem>>
    %111 = vector.broadcast %110 : i32 to vector<8x512xi32>
    %112 = arith.cmpi eq, %10, %111 : vector<8x512xi32>
    %113 = arith.andi %109, %112 : vector<8x512xi1>
    %c7_i32 = arith.constant 7 : i32
    %114 = vector.broadcast %c7_i32 : i32 to vector<8x512xi32>
    %115 = arith.select %113, %114, %102 : vector<8x512xi1>, vector<8x512xi32>
    %c0_7 = arith.constant 0 : index
    %116 = arith.index_cast %1 : i32 to index
    %117 = vector.load %arg3[%c0_7, %116] : memref<8x512xi32, #tpu.memory_space<vmem>>, vector<8x512xi32>
    tpu.vector_store %arg3[%c0_7, %116], %115 {strides = array<i32>} : memref<8x512xi32, #tpu.memory_space<vmem>>, vector<8x512xi32>,
    %c1_i32_8 = arith.constant 1 : i32
    return
  }
  func.func @transform_0(%arg0: i32, %arg1: memref<24xi32, #tpu.memory_space<smem>>) -> (i32, i32, i32) {
    %c0_i32 = arith.constant 0 : i32
    %c0_i32_0 = arith.constant 0 : i32
    %c0_i32_1 = arith.constant 0 : i32
    return %c0_i32, %c0_i32_0, %arg0 : i32, i32, i32
  }
  func.func @transform_1(%arg0: i32, %arg1: memref<24xi32, #tpu.memory_space<smem>>) -> (i32, i32) {
    %c0_i32 = arith.constant 0 : i32
    %c0_i32_0 = arith.constant 0 : i32
    return %c0_i32, %arg0 : i32, i32
  }
}

</mosaic_0001>

<llo_original>
// kernel: tpu_custom_call.1
$region0: #{tpu_custom_call.1}
  #allocation0 [shape = 'u32[]', space=smem, size = 0x4, offset = 0x4, fixed_abs, tag = 'smem constant byte address 0x4 - core index']
  #allocation1 [shape = 'u32[144,128]{1,0:T(1,128)}', space=vmem, size = 0x12000, scoped, tag = 'internal scratch']
  #allocation2 [shape = 's32[1]{0}', space=sflag, size = 0x4, scoped, tag = 'scoped memory for tpu_custom_call.1']
  #allocation3 [shape = 'u8[512]{0}', space=smem, size = 0x200, scoped, tag = 'prefetched SMEM operand 0']
  %s0 = inlined_call_operand.hbm [shape: s32[24], index: 0, kind: input, shape index: {}]
  %s1 = inlined_call_operand.hbm [shape: s32[3,8,512], index: 1, kind: input, shape index: {}]
  %s2 = inlined_call_operand.hbm [shape: s32[8,512], index: 2, kind: output, shape index: {}]
  %s3 = sld [smem:[#allocation0]]
  $region18: #{tpu_custom_call.1} parent=0
    _
  %s5 = ssub.s32 1, %s3
  %s6 = scalar_select 0, %s5, %s3
  %8 = dma.hbm_to_smem %s0, 16, [#allocation3], [#allocation2]
  %9 = dma.done [#allocation2], 16
  %10 = sfence
  $region1: #{tpu_custom_call.1} parent=0
    #allocation4 [shape = 'u8[49152]{0}', space=vmem, size = 0xc000, scoped, tag = 'input window, operand 1, single buffered']
    #allocation5 [shape = 's32[1]{0}', space=sflag, size = 0x4, scoped, tag = 'scoped memory for tpu_custom_call.1']
    #allocation6 [shape = 's32[1]{0}', space=sflag, size = 0x4, scoped, tag = 'scoped memory for tpu_custom_call.1']
    #allocation7 [shape = 'u8[16384]{0}', space=vmem, size = 0x4000, scoped, tag = 'output window, operand 0, single buffered']
    %11 = vsyncpa [#allocation5], 0
    %12 = vsyncpa [#allocation6], 0
    // Predicated region
    $region2: #{tpu_custom_call.1} parent=1 // pred_check
      _
    $region3: #{tpu_custom_call.1} parent=1 // pred_check_branch
      %14 = sbr.rel (0) target = $region5
    $region4: #{tpu_custom_call.1} parent=1 // pred_region
      %s16 = ssub.s32 1536, 1536
      %17 = vsyncadd [#allocation5], %s16
      %s18 = sshll.u32 [#allocation4], 4
      %s19 = int_to_ptr.vmem [resolvable:$true] %s18
      %24 = dma.hbm_to_vmem [thread:$0]  %s1, 1536, %s19, [#allocation5], 512, 512, 32
    $region5: #{tpu_custom_call.1} parent=1 // pred_fallthru
      _
    // Predicated region
    $region6: #{tpu_custom_call.1} parent=1 // pred_check
      _
    $region7: #{tpu_custom_call.1} parent=1 // pred_check_branch
      %26 = sbr.rel (0) target = $region9
    $region8: #{tpu_custom_call.1} parent=1 // pred_region
      %27 = dma.done [#allocation5], 1536
    $region9: #{tpu_custom_call.1} parent=1 // pred_fallthru
      _
    %v28 = vld [vmem:[#allocation4] sm:$0xff]
    %v29 = vld [vmem:[#allocation4 + $0x8] sm:$0xff]
    %v30 = vld [vmem:[#allocation4 + $0x10] sm:$0xff]
    %v31 = vld [vmem:[#allocation4 + $0x18] sm:$0xff]
    %s32 = sadd.s32 0, 4
    %s33 = smul.addr %s32, 8
    %s34 = scalar_lea.vmem [#allocation4], %s33
    %v35 = vld [vmem:[%s34] sm:$0xff]
    %v36 = vld [vmem:[%s34 + $0x8] sm:$0xff]
    %v37 = vld [vmem:[%s34 + $0x10] sm:$0xff]
    %v38 = vld [vmem:[%s34 + $0x18] sm:$0xff]
    %s39 = sadd.s32 0, 8
    %s40 = smul.addr %s39, 8
    %s41 = scalar_lea.vmem [#allocation4], %s40
    %v42 = vld [vmem:[%s41] sm:$0xff]
    %v43 = vld [vmem:[%s41 + $0x8] sm:$0xff]
    %v44 = vld [vmem:[%s41 + $0x10] sm:$0xff]
    %v45 = vld [vmem:[%s41 + $0x18] sm:$0xff]
    %s46 = sld [smem:[#allocation3]]
    %v47 = vstv %s46
    %vm48 = vcmp.eq.s32.totalorder %v28, %v47
    %vm49 = vcmp.eq.s32.totalorder %v29, %v47
    %vm50 = vcmp.eq.s32.totalorder %v30, %v47
    %vm51 = vcmp.eq.s32.totalorder %v31, %v47
    %s52 = sld [smem:[#allocation3 + $0x1]]
    %v53 = vstv %s52
    %vm54 = vcmp.eq.s32.totalorder %v35, %v53
    %vm55 = vcmp.eq.s32.totalorder %v36, %v53
    %vm56 = vcmp.eq.s32.totalorder %v37, %v53
    %vm57 = vcmp.eq.s32.totalorder %v38, %v53
    %vm58 = vmand %vm48, %vm54
    %vm59 = vmand %vm49, %vm55
    %vm60 = vmand %vm50, %vm56
    %vm61 = vmand %vm51, %vm57
    %s62 = sld [smem:[#allocation3 + $0x2]]
    %v63 = vstv %s62
    %vm64 = vcmp.eq.s32.totalorder %v42, %v63
    %vm65 = vcmp.eq.s32.totalorder %v43, %v63
    %vm66 = vcmp.eq.s32.totalorder %v44, %v63
    %vm67 = vcmp.eq.s32.totalorder %v45, %v63
    %vm68 = vmand %vm58, %vm64
    %vm69 = vmand %vm59, %vm65
    %vm70 = vmand %vm60, %vm66
    %vm71 = vmand %vm61, %vm67
    %v72 = vsel %vm68, 0, 4294967295
    %v73 = vsel %vm69, 0, 4294967295
    %v74 = vsel %vm70, 0, 4294967295
    %v75 = vsel %vm71, 0, 4294967295
    %s76 = sld [smem:[#allocation3 + $0x3]]
    %v77 = vstv %s76
    %vm78 = vcmp.eq.s32.totalorder %v28, %v77
    %vm79 = vcmp.eq.s32.totalorder %v29, %v77
    %vm80 = vcmp.eq.s32.totalorder %v30, %v77
    %vm81 = vcmp.eq.s32.totalorder %v31, %v77
    %s82 = sld [smem:[#allocation3 + $0x4]]
    %v83 = vstv %s82
    %vm84 = vcmp.eq.s32.totalorder %v35, %v83
    %vm85 = vcmp.eq.s32.totalorder %v36, %v83
    %vm86 = vcmp.eq.s32.totalorder %v37, %v83
    %vm87 = vcmp.eq.s32.totalorder %v38, %v83
    %vm88 = vmand %vm78, %vm84
    %vm89 = vmand %vm79, %vm85
    %vm90 = vmand %vm80, %vm86
    %vm91 = vmand %vm81, %vm87
    %s92 = sld [smem:[#allocation3 + $0x5]]
    %v93 = vstv %s92
    %vm94 = vcmp.eq.s32.totalorder %v42, %v93
    %vm95 = vcmp.eq.s32.totalorder %v43, %v93
    %vm96 = vcmp.eq.s32.totalorder %v44, %v93
    %vm97 = vcmp.eq.s32.totalorder %v45, %v93
    %vm98 = vmand %vm88, %vm94
    %vm99 = vmand %vm89, %vm95
    %vm100 = vmand %vm90, %vm96
    %vm101 = vmand %vm91, %vm97
    %v102 = vsel %vm98, 1, %v72
    %v103 = vsel %vm99, 1, %v73
    %v104 = vsel %vm100, 1, %v74
    %v105 = vsel %vm101, 1, %v75
    %s106 = sld [smem:[#allocation3 + $0x6]]
    %v107 = vstv %s106
    %vm108 = vcmp.eq.s32.totalorder %v28, %v107
    %vm109 = vcmp.eq.s32.totalorder %v29, %v107
    %vm110 = vcmp.eq.s32.totalorder %v30, %v107
    %vm111 = vcmp.eq.s32.totalorder %v31, %v107
    %s112 = sld [smem:[#allocation3 + $0x7]]
    %v113 = vstv %s112
    %vm114 = vcmp.eq.s32.totalorder %v35, %v113
    %vm115 = vcmp.eq.s32.totalorder %v36, %v113
    %vm116 = vcmp.eq.s32.totalorder %v37, %v113
    %vm117 = vcmp.eq.s32.totalorder %v38, %v113
    %vm118 = vmand %vm108, %vm114
    %vm119 = vmand %vm109, %vm115
    %vm120 = vmand %vm110, %vm116
    %vm121 = vmand %vm111, %vm117
    %s122 = sld [smem:[#allocation3 + $0x8]]
    %v123 = vstv %s122
    %vm124 = vcmp.eq.s32.totalorder %v42, %v123
    %vm125 = vcmp.eq.s32.totalorder %v43, %v123
    %vm126 = vcmp.eq.s32.totalorder %v44, %v123
    %vm127 = vcmp.eq.s32.totalorder %v45, %v123
    %vm128 = vmand %vm118, %vm124
    %vm129 = vmand %vm119, %vm125
    %vm130 = vmand %vm120, %vm126
    %vm131 = vmand %vm121, %vm127
    %v132 = vsel %vm128, 2, %v102
    %v133 = vsel %vm129, 2, %v103
    %v134 = vsel %vm130, 2, %v104
    %v135 = vsel %vm131, 2, %v105
    %s136 = sld [smem:[#allocation3 + $0x9]]
    %v137 = vstv %s136
    %vm138 = vcmp.eq.s32.totalorder %v28, %v137
    %vm139 = vcmp.eq.s32.totalorder %v29, %v137
    %vm140 = vcmp.eq.s32.totalorder %v30, %v137
    %vm141 = vcmp.eq.s32.totalorder %v31, %v137
    %s142 = sld [smem:[#allocation3 + $0xa]]
    %v143 = vstv %s142
    %vm144 = vcmp.eq.s32.totalorder %v35, %v143
    %vm145 = vcmp.eq.s32.totalorder %v36, %v143
    %vm146 = vcmp.eq.s32.totalorder %v37, %v143
    %vm147 = vcmp.eq.s32.totalorder %v38, %v143
    %vm148 = vmand %vm138, %vm144
    %vm149 = vmand %vm139, %vm145
    %vm150 = vmand %vm140, %vm146
    %vm151 = vmand %vm141, %vm147
    %s152 = sld [smem:[#allocation3 + $0xb]]
    %v153 = vstv %s152
    %vm154 = vcmp.eq.s32.totalorder %v42, %v153
    %vm155 = vcmp.eq.s32.totalorder %v43, %v153
    %vm156 = vcmp.eq.s32.totalorder %v44, %v153
    %vm157 = vcmp.eq.s32.totalorder %v45, %v153
    %vm158 = vmand %vm148, %vm154
    %vm159 = vmand %vm149, %vm155
    %vm160 = vmand %vm150, %vm156
    %vm161 = vmand %vm151, %vm157
    %v162 = vsel %vm158, 3, %v132
    %v163 = vsel %vm159, 3, %v133
    %v164 = vsel %vm160, 3, %v134
    %v165 = vsel %vm161, 3, %v135
    %s166 = sld [smem:[#allocation3 + $0xc]]
    %v167 = vstv %s166
    %vm168 = vcmp.eq.s32.totalorder %v28, %v167
    %vm169 = vcmp.eq.s32.totalorder %v29, %v167
    %vm170 = vcmp.eq.s32.totalorder %v30, %v167
    %vm171 = vcmp.eq.s32.totalorder %v31, %v167
    %s172 = sld [smem:[#allocation3 + $0xd]]
    %v173 = vstv %s172
    %vm174 = vcmp.eq.s32.totalorder %v35, %v173
    %vm175 = vcmp.eq.s32.totalorder %v36, %v173
    %vm176 = vcmp.eq.s32.totalorder %v37, %v173
    %vm177 = vcmp.eq.s32.totalorder %v38, %v173
    %vm178 = vmand %vm168, %vm174
    %vm179 = vmand %vm169, %vm175
    %vm180 = vmand %vm170, %vm176
    %vm181 = vmand %vm171, %vm177
    %s182 = sld [smem:[#allocation3 + $0xe]]
    %v183 = vstv %s182
    %vm184 = vcmp.eq.s32.totalorder %v42, %v183
    %vm185 = vcmp.eq.s32.totalorder %v43, %v183
    %vm186 = vcmp.eq.s32.totalorder %v44, %v183
    %vm187 = vcmp.eq.s32.totalorder %v45, %v183
    %vm188 = vmand %vm178, %vm184
    %vm189 = vmand %vm179, %vm185
    %vm190 = vmand %vm180, %vm186
    %vm191 = vmand %vm181, %vm187
    %v192 = vsel %vm188, 4, %v162
    %v193 = vsel %vm189, 4, %v163
    %v194 = vsel %vm190, 4, %v164
    %v195 = vsel %vm191, 4, %v165
    %s196 = sld [smem:[#allocation3 + $0xf]]
    %v197 = vstv %s196
    %vm198 = vcmp.eq.s32.totalorder %v28, %v197
    %vm199 = vcmp.eq.s32.totalorder %v29, %v197
    %vm200 = vcmp.eq.s32.totalorder %v30, %v197
    %vm201 = vcmp.eq.s32.totalorder %v31, %v197
    %s202 = sld [smem:[#allocation3 + $0x10]]
    %v203 = vstv %s202
    %vm204 = vcmp.eq.s32.totalorder %v35, %v203
    %vm205 = vcmp.eq.s32.totalorder %v36, %v203
    %vm206 = vcmp.eq.s32.totalorder %v37, %v203
    %vm207 = vcmp.eq.s32.totalorder %v38, %v203
    %vm208 = vmand %vm198, %vm204
    %vm209 = vmand %vm199, %vm205
    %vm210 = vmand %vm200, %vm206
    %vm211 = vmand %vm201, %vm207
    %s212 = sld [smem:[#allocation3 + $0x11]]
    %v213 = vstv %s212
    %vm214 = vcmp.eq.s32.totalorder %v42, %v213
    %vm215 = vcmp.eq.s32.totalorder %v43, %v213
    %vm216 = vcmp.eq.s32.totalorder %v44, %v213
    %vm217 = vcmp.eq.s32.totalorder %v45, %v213
    %vm218 = vmand %vm208, %vm214
    %vm219 = vmand %vm209, %vm215
    %vm220 = vmand %vm210, %vm216
    %vm221 = vmand %vm211, %vm217
    %v222 = vsel %vm218, 5, %v192
    %v223 = vsel %vm219, 5, %v193
    %v224 = vsel %vm220, 5, %v194
    %v225 = vsel %vm221, 5, %v195
    %s226 = sld [smem:[#allocation3 + $0x12]]
    %v227 = vstv %s226
    %vm228 = vcmp.eq.s32.totalorder %v28, %v227
    %vm229 = vcmp.eq.s32.totalorder %v29, %v227
    %vm230 = vcmp.eq.s32.totalorder %v30, %v227
    %vm231 = vcmp.eq.s32.totalorder %v31, %v227
    %s232 = sld [smem:[#allocation3 + $0x13]]
    %v233 = vstv %s232
    %vm234 = vcmp.eq.s32.totalorder %v35, %v233
    %vm235 = vcmp.eq.s32.totalorder %v36, %v233
    %vm236 = vcmp.eq.s32.totalorder %v37, %v233
    %vm237 = vcmp.eq.s32.totalorder %v38, %v233
    %vm238 = vmand %vm228, %vm234
    %vm239 = vmand %vm229, %vm235
    %vm240 = vmand %vm230, %vm236
    %vm241 = vmand %vm231, %vm237
    %s242 = sld [smem:[#allocation3 + $0x14]]
    %v243 = vstv %s242
    %vm244 = vcmp.eq.s32.totalorder %v42, %v243
    %vm245 = vcmp.eq.s32.totalorder %v43, %v243
    %vm246 = vcmp.eq.s32.totalorder %v44, %v243
    %vm247 = vcmp.eq.s32.totalorder %v45, %v243
    %vm248 = vmand %vm238, %vm244
    %vm249 = vmand %vm239, %vm245
    %vm250 = vmand %vm240, %vm246
    %vm251 = vmand %vm241, %vm247
    %v252 = vsel %vm248, 6, %v222
    %v253 = vsel %vm249, 6, %v223
    %v254 = vsel %vm250, 6, %v224
    %v255 = vsel %vm251, 6, %v225
    %s256 = sld [smem:[#allocation3 + $0x15]]
    %v257 = vstv %s256
    %vm258 = vcmp.eq.s32.totalorder %v28, %v257
    %vm259 = vcmp.eq.s32.totalorder %v29, %v257
    %vm260 = vcmp.eq.s32.totalorder %v30, %v257
    %vm261 = vcmp.eq.s32.totalorder %v31, %v257
    %s262 = sld [smem:[#allocation3 + $0x16]]
    %v263 = vstv %s262
    %vm264 = vcmp.eq.s32.totalorder %v35, %v263
    %vm265 = vcmp.eq.s32.totalorder %v36, %v263
    %vm266 = vcmp.eq.s32.totalorder %v37, %v263
    %vm267 = vcmp.eq.s32.totalorder %v38, %v263
    %vm268 = vmand %vm258, %vm264
    %vm269 = vmand %vm259, %vm265
    %vm270 = vmand %vm260, %vm266
    %vm271 = vmand %vm261, %vm267
    %s272 = sld [smem:[#allocation3 + $0x17]]
    %v273 = vstv %s272
    %vm274 = vcmp.eq.s32.totalorder %v42, %v273
    %vm275 = vcmp.eq.s32.totalorder %v43, %v273
    %vm276 = vcmp.eq.s32.totalorder %v44, %v273
    %vm277 = vcmp.eq.s32.totalorder %v45, %v273
    %vm278 = vmand %vm268, %vm274
    %vm279 = vmand %vm269, %vm275
    %vm280 = vmand %vm270, %vm276
    %vm281 = vmand %vm271, %vm277
    %v282 = vsel %vm278, 7, %v252
    %v283 = vsel %vm279, 7, %v253
    %v284 = vsel %vm280, 7, %v254
    %v285 = vsel %vm281, 7, %v255
    %286 = vst [vmem:[#allocation7] sm:$0xff] %v282
    %287 = vst [vmem:[#allocation7 + $0x8] sm:$0xff] %v283
    %288 = vst [vmem:[#allocation7 + $0x10] sm:$0xff] %v284
    %289 = vst [vmem:[#allocation7 + $0x18] sm:$0xff] %v285
    // Predicated region
    $region10: #{tpu_custom_call.1} parent=1 // pred_check
      _
    $region11: #{tpu_custom_call.1} parent=1 // pred_check_branch
      %291 = sbr.rel (0) target = $region13
    $region12: #{tpu_custom_call.1} parent=1 // pred_region
      %s293 = ssub.s32 512, 512
      %294 = vsyncadd [#allocation6], %s293
      %s296 = sshll.u32 [#allocation7], 4
      %s297 = int_to_ptr.vmem [resolvable:$true] %s296
      %299 = dma.vmem_to_hbm [thread:$0]  %s297, 512, %s2, [#allocation6]
    $region13: #{tpu_custom_call.1} parent=1 // pred_fallthru
      _
    // Predicated region
    $region14: #{tpu_custom_call.1} parent=1 // pred_check
      _
    $region15: #{tpu_custom_call.1} parent=1 // pred_check_branch
      %301 = sbr.rel (0) target = $region17
    $region16: #{tpu_custom_call.1} parent=1 // pred_region
      %302 = dma.done [#allocation6], 512
    $region17: #{tpu_custom_call.1} parent=1 // pred_fallthru
      _
    %303 = vsyncpa [#allocation5], 1
    %304 = vsyncpa [#allocation6], 1

</llo_original>
